<compile_context>
chip_gen: v6e
topology: v6e:2x2x1
jax: 0.10.0
libtpu: 0.0.40
codegen_flags: <defaults>
</compile_context>

<pallas_src>
import numpy as np
import jax
import jax.numpy as jnp
from jax.experimental import pallas as pl
from jax.experimental.pallas import tpu as pltpu


# ----------------------------------------------------------------------------
# Host-side construction of the downsample + reflect matrices
# ----------------------------------------------------------------------------
def _round_up(x: int, m: int) -> int:
    return (x + m - 1) // m * m


def _bicubic_kernel_1d(factor: int, a: float = -0.5) -> np.ndarray:
    """Same formula as PULSE BicubicDownSample (a=-0.5), sum-normalized."""
    size = 4 * factor
    xs = (np.arange(size, dtype=np.float64) - np.floor(size / 2) + 0.5) / factor
    ax = np.abs(xs)
    k = np.where(
        ax <= 1.0,
        (a + 2.0) * ax ** 3 - (a + 3.0) * ax ** 2 + 1.0,
        np.where(ax < 2.0,
                 a * ax ** 3 - 5.0 * a * ax ** 2 + 8.0 * a * ax - 4.0 * a,
                 0.0),
    )
    k = k / k.sum()
    return k.astype(np.float32)


def _downsample_matrix(n_out: int, n_in_padded: int, factor: int,
                       kern: np.ndarray) -> np.ndarray:
    """Rows = output samples; each row holds the bicubic taps at stride factor."""
    K = kern.shape[0]
    A = np.zeros((n_out, n_in_padded), dtype=np.float32)
    for i in range(n_out):
        A[i, i * factor:i * factor + K] = kern
    return A


def _reflect_matrix(n: int, pad_lo: int, pad_hi: int) -> np.ndarray:
    """R (n+pad_lo+pad_hi, n) with R @ x == reflect_pad(x) (edge not repeated)."""
    assert pad_lo < n and pad_hi < n, "reflect pad must be smaller than the dim"
    idx = np.concatenate([
        np.arange(pad_lo, 0, -1),              # left:  x[p], ..., x[1]
        np.arange(n),                          # body
        np.arange(n - 2, n - 2 - pad_hi, -1),  # right: x[n-2], ..., x[n-1-p]
    ])
    R = np.zeros((n + pad_lo + pad_hi, n), dtype=np.float32)
    R[np.arange(idx.shape[0]), idx] = 1.0
    return R


def _vmem_capacity_bytes() -> int:
    """Per-TensorCore VMEM capacity; conservative fallback = v7x's 64 MiB."""
    try:
        info = pltpu.get_tpu_info()
        for name in ("vmem_capacity_bytes", "vmem_bytes", "vmem_size_bytes"):
            cap = getattr(info, name, None)
            if cap:
                return int(cap)
    except Exception:
        pass
    return 64 * 1024 * 1024


def _choose_plane_count(nc: int, per_plane_bytes: int, budget_bytes: int,
                        cap: int = 128) -> int:
    """Planes per grid step: VMEM-budgeted, steps>=2 (megacore), prefer divisors."""
    target = max(1, budget_bytes // max(per_plane_bytes, 1))
    if nc >= 2:
        target = min(target, -(-nc // 2))   # keep steps >= 2 so both v7x TCs work
    target = int(min(target, nc, cap))
    # Prefer a divisor of nc close to the target (avoids zero-plane padding) ...
    for p in range(target, 0, -1):
        if nc % p == 0 and 2 * p > target:
            return p
    return target        # ... otherwise nc is padded up to a multiple of target


# ----------------------------------------------------------------------------
# Pallas implementation of DownsampleLoss.forward(sr, lr)
# ----------------------------------------------------------------------------
def downsample_loss(sr, lr, *, scale: int, clip_round: bool = False,
                    use_bf16: bool = True):
    """mean |bicubic_down(sr, factor=scale) - lr|  (nn.L1Loss, reduction='mean')."""
    # TODO(synk): clip_round=True (round + clamp between the two 1-D convs) is
    # not implemented; the module default is clip_round=False.
    assert not clip_round, "clip_round=True path not implemented"

    N, C, H, W = sr.shape
    Nl, Cl, Hl, Wl = lr.shape
    assert (Nl, Cl) == (N, C)

    K = 4 * scale
    pad = K - scale
    pt, pb = pad // 2, pad - pad // 2
    Hp, Wp = H + pad, W + pad
    Hout = (Hp - K) // scale + 1
    Wout = (Wp - K) // scale + 1
    assert (Hout, Wout) == (Hl, Wl), "lr shape must match downsampled sr shape"

    # --- bicubic taps with reflect padding folded in (host, numpy) ----------
    kern = _bicubic_kernel_1d(scale)
    Ap_np = _downsample_matrix(Hout, Hp, scale, kern) @ _reflect_matrix(H, pt, pb)        # (Hout, H)
    Bp_np = (_downsample_matrix(Wout, Wp, scale, kern) @ _reflect_matrix(W, pt, pb)).T    # (W, Wout)

    # Lane/sublane-dense zero padding: padded rows/cols of dsr and lr are
    # exactly zero so they add 0 to the L1 sum -> no masking needed.
    # TODO(synk): for Wout << 128 (large scale factors) pack several planes'
    # output columns into one 128-lane group instead of padding each to 128.
    Ho_pad = _round_up(Hout, 8)
    Wo_pad = _round_up(Wout, 128)
    Ap_np = np.pad(Ap_np, ((0, Ho_pad - Hout), (0, 0)))
    Bp_np = np.pad(Bp_np, ((0, 0), (0, Wo_pad - Wout)))
    mm_dtype = jnp.bfloat16 if use_bf16 else jnp.float32     # MXU input dtype
    Ap = jnp.asarray(Ap_np).astype(mm_dtype)                 # (Ho_pad, H)
    Bp = jnp.asarray(Bp_np).astype(mm_dtype)                 # (W, Wo_pad)

    # --- planes per grid step from the per-generation VMEM budget -----------
    NC = N * C
    in_b, lr_b = sr.dtype.itemsize, lr.dtype.itemsize
    mm_b = jnp.dtype(mm_dtype).itemsize
    per_plane = (2 * H * W * in_b                  # sr block (double-buffered)
                 + 2 * Ho_pad * Wo_pad * lr_b      # lr block (double-buffered)
                 + 2 * Wo_pad * 4                  # out block (double-buffered)
                 + H * W * mm_b                    # x cast to MXU dtype
                 + H * Wo_pad * (4 + 4 + mm_b)     # y, yt relayout, yt cast
                 + 2 * Ho_pad * Wo_pad * 4)        # dsr, |diff|
    vmem_cap = _vmem_capacity_bytes()              # 64 MiB v7x / 128 MiB v5e,v6e
    fixed = 4 * int(Ap.size + Bp.size) * mm_b      # resident A'/B' (+ headroom)
    budget = max(per_plane, int(0.45 * vmem_cap) - fixed)
    P = _choose_plane_count(NC, per_plane, budget)
    steps = -(-NC // P)
    NC_pad = steps * P

    # --- layout plumbing -----------------------------------------------------
    x_f = sr.reshape(NC, H, W)
    if NC_pad != NC:        # awkward NC: append all-zero planes (add 0 to L1)
        x_f = jnp.concatenate(
            [x_f, jnp.zeros((NC_pad - NC, H, W), sr.dtype)], axis=0)
    x_f = x_f.reshape(steps, P * H, W)

    lr_f = lr.reshape(NC, Hout, Wout)
    if (NC_pad, Ho_pad, Wo_pad) != (NC, Hout, Wout):
        lr_f = jnp.pad(lr_f, ((0, NC_pad - NC),
                              (0, Ho_pad - Hout), (0, Wo_pad - Wout)))
    # planes packed along lanes, matching the kernel's dsr layout (small array)
    lr_f = (lr_f.reshape(steps, P, Ho_pad, Wo_pad)
                .transpose(0, 2, 1, 3)
                .reshape(steps, Ho_pad, P * Wo_pad))

    def kernel(Ap_ref, Bp_ref, x_ref, lr_ref, out_ref):
        x = x_ref[0].astype(mm_dtype)                                     # (P*H, W)
        # width contraction batched over all P planes -> one wide MXU matmul
        y = jnp.dot(x, Bp_ref[...], preferred_element_type=jnp.float32)  # (P*H, Wo_pad) f32
        # relayout (P*H, Wo_pad) -> (H, P*Wo_pad): planes along lanes so the
        # height contraction is ONE wide matmul instead of P skinny ones.
        # (slices are sublane-aligned when H % 8 == 0; lane concat of 128-wide
        #  pieces rides vld/vst slots, not MXU/VALU.)
        if P > 1:
            yt = jnp.concatenate([y[p * H:(p + 1) * H, :] for p in range(P)],
                                 axis=1)                                  # (H, P*Wo_pad)
        else:
            yt = y
        dsr = jnp.dot(Ap_ref[...], yt.astype(mm_dtype),
                      preferred_element_type=jnp.float32)                 # (Ho_pad, P*Wo_pad)
        diff = jnp.abs(dsr - lr_ref[0].astype(jnp.float32))
        # sublane reduce only; cross-lane / cross-step reduce happens in JAX
        out_ref[0] = jnp.sum(diff, axis=0, keepdims=True)                 # (1, P*Wo_pad)

    flops = int(2 * NC_pad * H * Wo_pad * (W + Ho_pad))
    bytes_accessed = int(x_f.size * in_b + lr_f.size * lr_b
                         + steps * P * Wo_pad * 4           # lane partial sums
                         + (Ap.size + Bp.size) * mm_b)      # A'/B' DMA'd once

    partials = pl.pallas_call(
        kernel,
        out_shape=jax.ShapeDtypeStruct((steps, 1, P * Wo_pad), jnp.float32),
        grid_spec=pltpu.PrefetchScalarGridSpec(
            num_scalar_prefetch=0,
            grid=(steps,),
            in_specs=[
                pl.BlockSpec((Ho_pad, H), lambda i: (0, 0)),                 # A' (resident)
                pl.BlockSpec((W, Wo_pad), lambda i: (0, 0)),                 # B' (resident)
                pl.BlockSpec((1, P * H, W), lambda i: (i, 0, 0)),            # sr planes
                pl.BlockSpec((1, Ho_pad, P * Wo_pad), lambda i: (i, 0, 0)),  # lr planes
            ],
            out_specs=pl.BlockSpec((1, 1, P * Wo_pad), lambda i: (i, 0, 0)),
        ),
        compiler_params=pltpu.CompilerParams(
            # no cross-step state -> plane axis stays parallel (v7x megacore)
            dimension_semantics=("parallel",),
            vmem_limit_bytes=int(0.75 * vmem_cap),   # ~48 MiB v7x / ~96 MiB v5e,v6e
        ),
        cost_estimate=pl.CostEstimate(
            flops=flops, transcendentals=0, bytes_accessed=bytes_accessed),
    )(Ap, Bp, x_f, lr_f)

    return jnp.sum(partials) / jnp.float32(NC * Hout * Wout)


# ----------------------------------------------------------------------------
# Pure-JAX reference (explicit reflect pad + einsum) for correctness check
# ----------------------------------------------------------------------------
def downsample_loss_reference(sr, lr, *, scale: int):
    N, C, H, W = sr.shape
    kern = _bicubic_kernel_1d(scale)
    K = 4 * scale
    pad = K - scale
    pt, pb = pad // 2, pad - pad // 2
    srp = jnp.pad(sr, ((0, 0), (0, 0), (pt, pb), (pt, pb)), mode="reflect")
    Hp, Wp = H + pad, W + pad
    Hout = (Hp - K) // scale + 1
    Wout = (Wp - K) // scale + 1
    A = jnp.asarray(_downsample_matrix(Hout, Hp, scale, kern))
    B = jnp.asarray(_downsample_matrix(Wout, Wp, scale, kern).T)
    dsr = jnp.einsum("ph,nchw,wq->ncpq", A, srp, B)
    return jnp.mean(jnp.abs(dsr - lr))


if __name__ == "__main__":
    key = jax.random.PRNGKey(0)
    k1, k2 = jax.random.split(key)

    N, C, H, W = 2, 3, 16, 16
    scale = 2

    sr = jax.random.uniform(k1, (N, C, H, W), jnp.float32)
    lr = jax.random.uniform(k2, (N, C, H // scale, W // scale), jnp.float32)

    ref = downsample_loss_reference(sr, lr, scale=scale)

    # all-f32 path: tight structural/numerical check against the reference
    loss_f32 = jax.block_until_ready(
        downsample_loss(sr, lr, scale=scale, use_bf16=False))
    np.testing.assert_allclose(np.asarray(loss_f32), np.asarray(ref),
                               rtol=1e-5, atol=1e-6)

    # default fast path: bf16 MXU feed with f32 accumulation -> loose tolerance
    loss = jax.block_until_ready(downsample_loss(sr, lr, scale=scale))
    np.testing.assert_allclose(np.asarray(loss), np.asarray(ref),
                               rtol=2e-2, atol=2e-3)

    print("KERNEL_OK")
</pallas_src>

<mosaic_0001>
module attributes {stable_mosaic.version = 11 : i64} {
  func.func @kernel(%arg0: i32, %arg1: memref<8x16xf32, #tpu.memory_space<vmem>>, %arg2: memref<16x128xf32, #tpu.memory_space<vmem>>, %arg3: memref<1x48x16xf32, #tpu.memory_space<vmem>>, %arg4: memref<1x8x384xf32, #tpu.memory_space<vmem>>, %arg5: memref<1x1x384xf32, #tpu.memory_space<vmem>>) attributes {dimension_semantics = [#tpu.dimension_semantics<parallel>], iteration_bounds = array<i64: 2>, scalar_prefetch = 0 : i64, scratch_operands = 0 : i64, tpu.core_type = #tpu.core_type<tc>, window_params = [{pipeline_mode = #tpu.pipeline_mode<synchronous>, transform_indices = @transform_0, window_bounds = array<i64: 8, 16>}, {pipeline_mode = #tpu.pipeline_mode<synchronous>, transform_indices = @transform_1, window_bounds = array<i64: 16, 128>}, {transform_indices = @transform_2, window_bounds = array<i64: 1, 48, 16>}, {transform_indices = @transform_3, window_bounds = array<i64: 1, 8, 384>}, {transform_indices = @transform_4, window_bounds = array<i64: 1, 1, 384>}]} {
    %c0 = arith.constant 0 : index
    %c0_0 = arith.constant 0 : index
    %c0_1 = arith.constant 0 : index
    %0 = vector.load %arg3[%c0, %c0_0, %c0_1] : memref<1x48x16xf32, #tpu.memory_space<vmem>>, vector<1x48x16xf32>
    %1 = vector.shape_cast %0 : vector<1x48x16xf32> to vector<48x16xf32>
    %c0_2 = arith.constant 0 : index
    %c0_3 = arith.constant 0 : index
    %2 = vector.load %arg2[%c0_2, %c0_3] : memref<16x128xf32, #tpu.memory_space<vmem>>, vector<16x128xf32>
    %cst = arith.constant dense<0.000000e+00> : vector<48x128xf32>
    %3 = tpu.matmul %1, %2, %cst {dimension_numbers = #tpu.dot_dimension_numbers<[1], [0], [0], [1], [0, 0, 1, 1], [], []>} : vector<48x16xf32>, vector<16x128xf32>, vector<48x128xf32> -> vector<48x128xf32>
    %4 = vector.extract_strided_slice %3 {offsets = [0, 0], sizes = [16, 128], strides = [1, 1]} : vector<48x128xf32> to vector<16x128xf32>
    %5 = vector.extract_strided_slice %3 {offsets = [16, 0], sizes = [16, 128], strides = [1, 1]} : vector<48x128xf32> to vector<16x128xf32>
    %6 = vector.extract_strided_slice %3 {offsets = [32, 0], sizes = [16, 128], strides = [1, 1]} : vector<48x128xf32> to vector<16x128xf32>
    %7 = tpu.concatenate %4, %5, %6 in 1 : vector<16x128xf32>, vector<16x128xf32>, vector<16x128xf32> -> vector<16x384xf32>
    %c0_4 = arith.constant 0 : index
    %c0_5 = arith.constant 0 : index
    %8 = vector.load %arg1[%c0_4, %c0_5] : memref<8x16xf32, #tpu.memory_space<vmem>>, vector<8x16xf32>
    %cst_6 = arith.constant dense<0.000000e+00> : vector<8x384xf32>
    %9 = tpu.matmul %8, %7, %cst_6 {dimension_numbers = #tpu.dot_dimension_numbers<[1], [0], [0], [1], [0, 0, 1, 1], [], []>} : vector<8x16xf32>, vector<16x384xf32>, vector<8x384xf32> -> vector<8x384xf32>
    %c0_7 = arith.constant 0 : index
    %c0_8 = arith.constant 0 : index
    %c0_9 = arith.constant 0 : index
    %10 = vector.load %arg4[%c0_7, %c0_8, %c0_9] : memref<1x8x384xf32, #tpu.memory_space<vmem>>, vector<1x8x384xf32>
    %11 = vector.shape_cast %10 : vector<1x8x384xf32> to vector<8x384xf32>
    %12 = arith.subf %9, %11 : vector<8x384xf32>
    %13 = math.absf %12 : vector<8x384xf32>
    %cst_10 = arith.constant dense<0.000000e+00> : vector<384xf32>
    %14 = vector.multi_reduction <add>, %13, %cst_10 [0] : vector<8x384xf32> to vector<384xf32>
    %15 = vector.shape_cast %14 : vector<384xf32> to vector<1x384xf32>
    %c0_11 = arith.constant 0 : index
    %c0_12 = arith.constant 0 : index
    %c0_13 = arith.constant 0 : index
    %16 = vector.load %arg5[%c0_11, %c0_12, %c0_13] : memref<1x1x384xf32, #tpu.memory_space<vmem>>, vector<1x1x384xf32>
    %17 = vector.shape_cast %16 : vector<1x1x384xf32> to vector<1x384xf32>
    %18 = vector.shape_cast %15 : vector<1x384xf32> to vector<1x1x384xf32>
    tpu.vector_store %arg5[%c0_11, %c0_12, %c0_13], %18 {strides = array<i32>} : memref<1x1x384xf32, #tpu.memory_space<vmem>>, vector<1x1x384xf32>,
    return
  }
  func.func @transform_0(%arg0: i32) -> (i32, i32) {
    %c0_i32 = arith.constant 0 : i32
    %c0_i32_0 = arith.constant 0 : i32
    %c0_i32_1 = arith.constant 0 : i32
    return %c0_i32, %c0_i32_0 : i32, i32
  }
  func.func @transform_1(%arg0: i32) -> (i32, i32) {
    %c0_i32 = arith.constant 0 : i32
    %c0_i32_0 = arith.constant 0 : i32
    %c0_i32_1 = arith.constant 0 : i32
    return %c0_i32, %c0_i32_0 : i32, i32
  }
  func.func @transform_2(%arg0: i32) -> (i32, i32, i32) {
    %c0_i32 = arith.constant 0 : i32
    %c0_i32_0 = arith.constant 0 : i32
    %c0_i32_1 = arith.constant 0 : i32
    return %arg0, %c0_i32, %c0_i32_0 : i32, i32, i32
  }
  func.func @transform_3(%arg0: i32) -> (i32, i32, i32) {
    %c0_i32 = arith.constant 0 : i32
    %c0_i32_0 = arith.constant 0 : i32
    %c0_i32_1 = arith.constant 0 : i32
    return %arg0, %c0_i32, %c0_i32_0 : i32, i32, i32
  }
  func.func @transform_4(%arg0: i32) -> (i32, i32, i32) {
    %c0_i32 = arith.constant 0 : i32
    %c0_i32_0 = arith.constant 0 : i32
    %c0_i32_1 = arith.constant 0 : i32
    return %arg0, %c0_i32, %c0_i32_0 : i32, i32, i32
  }
}

</mosaic_0001>

<llo_original>
// kernel: tpu_custom_call.1
$region0: #{tpu_custom_call.1}
  #allocation0 [shape = 'u32[]', space=smem, size = 0x4, offset = 0x4, fixed_abs, tag = 'smem constant byte address 0x4 - core index']
  #allocation1 [shape = 'u32[144,128]{1,0:T(1,128)}', space=vmem, size = 0x12000, scoped, tag = 'internal scratch']
  %s0 = inlined_call_operand.vmem [shape: f32[8,16], index: 0, kind: input, shape index: {}]
  %s1 = inlined_call_operand.vmem [shape: f32[16,128], index: 1, kind: input, shape index: {}]
  %s2 = inlined_call_operand.vmem [shape: f32[2,48,16], index: 2, kind: input, shape index: {}]
  %s3 = inlined_call_operand.vmem [shape: f32[2,8,384], index: 3, kind: input, shape index: {}]
  %s4 = inlined_call_operand.hbm [shape: f32[2,1,384], index: 4, kind: output, shape index: {}]
  %s5 = sld [smem:[#allocation0]]
  $region49: #{tpu_custom_call.1} parent=0
    _
  %s7 = ssub.s32 1, %s5
  %s8 = scalar_select 0, %s7, %s5
  $region1: #{tpu_custom_call.1} parent=0
    #allocation2 [shape = 'u8[3072]{0}', space=vmem, size = 0xc00, scoped, tag = 'output window, operand 0']
    #allocation3 [shape = 's32[2]{0}', space=sflag, size = 0x8, scoped, tag = 'scoped memory for tpu_custom_call.1']
    %9 = vsyncpa [#allocation3], 0
    %s10 = scalar_lea.sflag [#allocation3], 1
    %11 = vsyncpa %s10, 0
    loop: start=0, step=1, limit=4
    $region2: #{tpu_custom_call.1} parent=1 // loop_pre_header
      _
    $region3: #{tpu_custom_call.1} parent=1 // loop_header
      %s13 = sphi 0, %s17
      %p14 = scmp.ge.s32.totalorder %s13, 4
      %s21 = sphi 0, %s21
      %s23 = sphi 0, %s21
      %s24 = sphi 0, %s23
      %s38 = sphi 0, %s24
      %s42 = sphi 0, %s42
      %s44 = sphi 0, %s42
      %s45 = sphi 0, %s44
      %s59 = sphi 0, %s45
      %s65 = sphi 0, %s67
      %s68 = sphi 0, %s65
      %s69 = sphi 0, %s68
      %s85 = sphi 0, %s69
      %s91 = sphi 0, %s93
      %s94 = sphi 0, %s91
      %s95 = sphi 0, %s94
      %s111 = sphi 0, %s95
      %s117 = sphi 0, %s119
      %s120 = sphi 0, %s117
      %s121 = sphi 0, %s120
      %s137 = sphi 0, %s121
    $region4: #{tpu_custom_call.1} parent=1 // loop_header_branch
      %16 = sbr.rel (%p14) target = $region8
    $region5: #{tpu_custom_call.1} parent=1 // loop_body
      %s18 = ssub.s32 %s13, 1
      %s19 = ssub.s32 %s13, 2
      %s20 = sadd.s32 %s13, 1
      %s22 = sadd.s32 %s21, 1
      %p25 = scmp.eq.s32.totalorder %s13, 1
      %p26 = scmp.ne.s32.totalorder %s21, %s23
      %p27 = scmp.eq.s32.totalorder %s13, 0
      %p28 = por %p26, %p27
      %p29 = scmp.ne.s32.totalorder %s21, %s23
      %p30 = scmp.eq.s32.totalorder %s18, 1
      %p31 = por %p29, %p30
      %p32 = scmp.ne.s32.totalorder %s23, %s24
      %p33 = scmp.eq.s32.totalorder %s18, 0
      %p34 = por %p32, %p33
      %p35 = scmp.ne.s32.totalorder %s23, %s24
      %p36 = scmp.eq.s32.totalorder %s19, 1
      %p37 = por %p35, %p36
      %p39 = scmp.ne.s32.totalorder %s24, %s38
      %p40 = scmp.eq.s32.totalorder %s19, 0
      %p41 = por %p39, %p40
      %s43 = sadd.s32 %s42, 1
      %p46 = scmp.eq.s32.totalorder %s13, 1
      %p47 = scmp.ne.s32.totalorder %s42, %s44
      %p48 = scmp.eq.s32.totalorder %s13, 0
      %p49 = por %p47, %p48
      %p50 = scmp.ne.s32.totalorder %s42, %s44
      %p51 = scmp.eq.s32.totalorder %s18, 1
      %p52 = por %p50, %p51
      %p53 = scmp.ne.s32.totalorder %s44, %s45
      %p54 = scmp.eq.s32.totalorder %s18, 0
      %p55 = por %p53, %p54
      %p56 = scmp.ne.s32.totalorder %s44, %s45
      %p57 = scmp.eq.s32.totalorder %s19, 1
      %p58 = por %p56, %p57
      %p60 = scmp.ne.s32.totalorder %s45, %s59
      %p61 = scmp.eq.s32.totalorder %s19, 0
      %p62 = por %p60, %p61
      %s63 = ssub.s32 %s13, %s20
      %p64 = scmp.eq.s32.totalorder %s63, 0
      %s66 = sadd.s32 %s65, 1
      %s67 = scalar_select %p64, %s65, %s66
      %p70 = pneg %p64
      %p71 = scmp.eq.s32.totalorder %s13, 1
      %p72 = por %p70, %p71
      %p73 = scmp.ne.s32.totalorder %s65, %s68
      %p74 = scmp.eq.s32.totalorder %s13, 0
      %p75 = por %p73, %p74
      %p76 = scmp.ne.s32.totalorder %s65, %s68
      %p77 = scmp.eq.s32.totalorder %s18, 1
      %p78 = por %p76, %p77
      %p79 = scmp.ne.s32.totalorder %s68, %s69
      %p80 = scmp.eq.s32.totalorder %s18, 0
      %p81 = por %p79, %p80
      %p82 = scmp.ne.s32.totalorder %s68, %s69
      %p83 = scmp.eq.s32.totalorder %s19, 1
      %p84 = por %p82, %p83
      %p86 = scmp.ne.s32.totalorder %s69, %s85
      %p87 = scmp.eq.s32.totalorder %s19, 0
      %p88 = por %p86, %p87
      %s89 = ssub.s32 %s13, %s20
      %p90 = scmp.eq.s32.totalorder %s89, 0
      %s92 = sadd.s32 %s91, 1
      %s93 = scalar_select %p90, %s91, %s92
      %p96 = pneg %p90
      %p97 = scmp.eq.s32.totalorder %s13, 1
      %p98 = por %p96, %p97
      %p99 = scmp.ne.s32.totalorder %s91, %s94
      %p100 = scmp.eq.s32.totalorder %s13, 0
      %p101 = por %p99, %p100
      %p102 = scmp.ne.s32.totalorder %s91, %s94
      %p103 = scmp.eq.s32.totalorder %s18, 1
      %p104 = por %p102, %p103
      %p105 = scmp.ne.s32.totalorder %s94, %s95
      %p106 = scmp.eq.s32.totalorder %s18, 0
      %p107 = por %p105, %p106
      %p108 = scmp.ne.s32.totalorder %s94, %s95
      %p109 = scmp.eq.s32.totalorder %s19, 1
      %p110 = por %p108, %p109
      %p112 = scmp.ne.s32.totalorder %s95, %s111
      %p113 = scmp.eq.s32.totalorder %s19, 0
      %p114 = por %p112, %p113
      %s115 = ssub.s32 %s13, %s20
      %p116 = scmp.eq.s32.totalorder %s115, 0
      %s118 = sadd.s32 %s117, 1
      %s119 = scalar_select %p116, %s117, %s118
      %p122 = pneg %p116
      %p123 = scmp.eq.s32.totalorder %s13, 1
      %p124 = por %p122, %p123
      %p125 = scmp.ne.s32.totalorder %s117, %s120
      %p126 = scmp.eq.s32.totalorder %s13, 0
      %p127 = por %p125, %p126
      %p128 = scmp.ne.s32.totalorder %s117, %s120
      %p129 = scmp.eq.s32.totalorder %s18, 1
      %p130 = por %p128, %p129
      %p131 = scmp.ne.s32.totalorder %s120, %s121
      %p132 = scmp.eq.s32.totalorder %s18, 0
      %p133 = por %p131, %p132
      %p134 = scmp.ne.s32.totalorder %s120, %s121
      %p135 = scmp.eq.s32.totalorder %s19, 1
      %p136 = por %p134, %p135
      %p138 = scmp.ne.s32.totalorder %s121, %s137
      %p139 = scmp.eq.s32.totalorder %s19, 0
      %p140 = por %p138, %p139
      %p141 = scmp.le.s32.totalorder 1, %s13
      %p142 = scmp.lt.s32.totalorder %s13, 3
      %p143 = pnand %p141, %p142
      %p144 = pneg %p143
      // Predicated region
      $region9: #{tpu_custom_call.1} parent=5 // pred_check
        _
      $region10: #{tpu_custom_call.1} parent=5 // pred_check_branch
        %146 = sbr.rel (%p143) target = $region12
      $region11: #{tpu_custom_call.1} parent=5 // pred_region
        %s147 = ssub.s32 %s13, 1
        // Predicated region
        $region13: #{tpu_custom_call.1} parent=11 // pred_check
          %p148 = pneg %p34
        $region14: #{tpu_custom_call.1} parent=11 // pred_check_branch
          %150 = sbr.rel (%p148) target = $region16
        $region15: #{tpu_custom_call.1} parent=11 // pred_region
          _
        $region16: #{tpu_custom_call.1} parent=11 // pred_fallthru
          _
        // Predicated region
        $region17: #{tpu_custom_call.1} parent=11 // pred_check
          %p151 = pneg %p55
        $region18: #{tpu_custom_call.1} parent=11 // pred_check_branch
          %153 = sbr.rel (%p151) target = $region20
        $region19: #{tpu_custom_call.1} parent=11 // pred_region
          _
        $region20: #{tpu_custom_call.1} parent=11 // pred_fallthru
          _
      $region12: #{tpu_custom_call.1} parent=5 // pred_fallthru
        _
      %p154 = scmp.lt.s32.totalorder %s13, 2
      // Predicated region
      $region21: #{tpu_custom_call.1} parent=5 // pred_check
        %p155 = pneg %p154
      $region22: #{tpu_custom_call.1} parent=5 // pred_check_branch
        %157 = sbr.rel (%p155) target = $region24
      $region23: #{tpu_custom_call.1} parent=5 // pred_region
        // Predicated region
        $region25: #{tpu_custom_call.1} parent=23 // pred_check
          %p158 = pneg %p75
        $region26: #{tpu_custom_call.1} parent=23 // pred_check_branch
          %160 = sbr.rel (%p158) target = $region28
        $region27: #{tpu_custom_call.1} parent=23 // pred_region
          %p161 = scmp.lt.s32.totalorder %s13, 1
          %s162 = scalar_select %p161, %s13, 1
          %s163 = smul.addr %s162, 6
          %s164 = smul.addr %s163, 8
          %s165 = scalar_lea.vmem %s2, %s164
        $region28: #{tpu_custom_call.1} parent=23 // pred_fallthru
          _
        // Predicated region
        $region29: #{tpu_custom_call.1} parent=23 // pred_check
          %p166 = pneg %p101
        $region30: #{tpu_custom_call.1} parent=23 // pred_check_branch
          %168 = sbr.rel (%p166) target = $region32
        $region31: #{tpu_custom_call.1} parent=23 // pred_region
          %p169 = scmp.lt.s32.totalorder %s13, 1
          %s170 = scalar_select %p169, %s13, 1
          %s171 = smul.addr %s170, 3
          %s172 = smul.addr %s171, 8
          %s173 = scalar_lea.vmem %s3, %s172
        $region32: #{tpu_custom_call.1} parent=23 // pred_fallthru
          _
      $region24: #{tpu_custom_call.1} parent=5 // pred_fallthru
        _
      %p174 = scmp.le.s32.totalorder 1, %s13
      %p175 = scmp.lt.s32.totalorder %s13, 3
      %p176 = pnand %p174, %p175
      %p177 = pneg %p176
      // Predicated region
      $region33: #{tpu_custom_call.1} parent=5 // pred_check
        _
      $region34: #{tpu_custom_call.1} parent=5 // pred_check_branch
        %179 = sbr.rel (%p176) target = $region36
      $region35: #{tpu_custom_call.1} parent=5 // pred_region
        %s180 = ssub.s32 %s13, 1
        %p181 = pneg %p34
        %p182 = pneg %p31
        %p183 = pneg %p55
        %p184 = pneg %p52
        %p185 = scmp.lt.s32.totalorder %s18, 1
        %s186 = scalar_select %p185, %s18, 1
        %s187 = smul.addr %s186, 6
        %s188 = smul.addr %s187, 8
        %s189 = scalar_lea.vmem %s2, %s188
        %p190 = pneg %p81
        %p191 = pneg %p78
        %p192 = scmp.lt.s32.totalorder %s18, 1
        %s193 = scalar_select %p192, %s18, 1
        %s194 = smul.addr %s193, 3
        %s195 = smul.addr %s194, 8
        %s196 = scalar_lea.vmem %s3, %s195
        %p197 = pneg %p107
        %p198 = pneg %p104
        %p199 = pneg %p133
        %p200 = pneg %p130
        %s201 = sand.u32 %s120, 1
        %s202 = scalar_lea.sflag [#allocation3], %s201
        %s203 = sand.u32 %s120, 1
        %s204 = smul.addr %s203, 3
        %s205 = scalar_lea.vmem [#allocation2], %s204
        %p206 = scmp.lt.s32.totalorder %s18, 1
        %s207 = scalar_select %p206, %s18, 1
        %s208 = smul.addr %s207, 6
        %s209 = smul.addr %s208, 8
        %s210 = scalar_lea.vmem %s2, %s209
        %p211 = scmp.lt.s32.totalorder %s18, 1
        %s212 = scalar_select %p211, %s18, 1
        %s213 = smul.addr %s212, 3
        %s214 = smul.addr %s213, 8
        %s215 = scalar_lea.vmem %s3, %s214
        %v216 = vld [vmem:[%s210] sm:$0xff]
        %v217 = vld [vmem:[%s210 + $0x8] sm:$0xff]
        %v218 = vld [vmem:[%s210 + $0x10] sm:$0xff]
        %v219 = vld [vmem:[%s210 + $0x18] sm:$0xff]
        %v220 = vld [vmem:[%s210 + $0x20] sm:$0xff]
        %v221 = vld [vmem:[%s210 + $0x28] sm:$0xff]
        %v222 = vld [vmem:[%s1] sm:$0xff]
        %v223 = vld [vmem:[%s1 + $0x8] sm:$0xff]
        %vm224 = vcmask 130048
        %v226 = vsel %vm224, %v216, 0
        %v229 = vsel %vm224, %v217, 0
        %v232 = vsel %vm224, %v218, 0
        %v235 = vsel %vm224, %v219, 0
        %v238 = vsel %vm224, %v220, 0
        %v241 = vsel %vm224, %v221, 0
        %243 = vmatprep.subr.mxu0 0.0
        %244 = vmatpush1.msra.mxu0 0.0
        %245 = vmatprep.subr.mxu0 0.0
        %246 = vmatpush1.msra.mxu0 0.0
        %247 = vmatprep.subr.mxu0 0.0
        %248 = vmatpush1.msra.mxu0 0.0
        %249 = vmatprep.subr.mxu0 0.0
        %250 = vmatpush1.msra.mxu0 0.0
        %251 = vmatprep.subr.mxu0 0.0
        %252 = vmatpush1.msra.mxu0 0.0
        %253 = vmatprep.subr.mxu0 0.0
        %254 = vmatpush1.msra.mxu0 0.0
        %255 = vmatprep.subr.mxu0 0.0
        %256 = vmatpush1.msra.mxu0 0.0
        %257 = vmatprep.subr.mxu0 0.0
        %258 = vmatpush1.msra.mxu0 0.0
        %259 = vmatprep.subr.mxu0 0.0
        %260 = vmatpush1.msra.mxu0 0.0
        %261 = vmatprep.subr.mxu0 0.0
        %262 = vmatpush1.msra.mxu0 0.0
        %263 = vmatprep.subr.mxu0 0.0
        %264 = vmatpush1.msra.mxu0 0.0
        %265 = vmatprep.subr.mxu0 0.0
        %266 = vmatpush1.msra.mxu0 0.0
        %267 = vmatprep.subr.mxu0 0.0
        %268 = vmatpush1.msra.mxu0 0.0
        %269 = vmatprep.subr.mxu0 0.0
        %270 = vmatpush1.msra.mxu0 0.0
        %271 = vmatprep.subr.mxu0 0.0
        %272 = vmatpush1.msra.mxu0 %v223
        %273 = vmatprep.subr.mxu0 0.0
        %274 = vmatpush1.msra.mxu0 %v222
        %275 = vmatprep.subr.mxu0 0.0
        %276 = vmatpush2.msra.mxu0 0.0
        %277 = vmatprep.subr.mxu0 0.0
        %278 = vmatpush2.msra.mxu0 0.0
        %279 = vmatprep.subr.mxu0 0.0
        %280 = vmatpush2.msra.mxu0 0.0
        %281 = vmatprep.subr.mxu0 0.0
        %282 = vmatpush2.msra.mxu0 0.0
        %283 = vmatprep.subr.mxu0 0.0
        %284 = vmatpush2.msra.mxu0 0.0
        %285 = vmatprep.subr.mxu0 0.0
        %286 = vmatpush2.msra.mxu0 0.0
        %287 = vmatprep.subr.mxu0 0.0
        %288 = vmatpush2.msra.mxu0 0.0
        %289 = vmatprep.subr.mxu0 0.0
        %290 = vmatpush2.msra.mxu0 0.0
        %291 = vmatprep.subr.mxu0 0.0
        %292 = vmatpush2.msra.mxu0 0.0
        %293 = vmatprep.subr.mxu0 0.0
        %294 = vmatpush2.msra.mxu0 0.0
        %295 = vmatprep.subr.mxu0 0.0
        %296 = vmatpush2.msra.mxu0 0.0
        %297 = vmatprep.subr.mxu0 0.0
        %298 = vmatpush2.msra.mxu0 0.0
        %299 = vmatprep.subr.mxu0 0.0
        %300 = vmatpush2.msra.mxu0 0.0
        %301 = vmatprep.subr.mxu0 0.0
        %302 = vmatpush2.msra.mxu0 0.0
        %303 = vmatprep.subr.mxu0 0.0
        %304 = vmatpush2.msra.mxu0 0.0
        %305 = vmatprep.subr.mxu0 0.0
        %306 = vmatpush2.msra.mxu0 0.0
        %307 = vmatprep.mubr.f32.mxu0 0.0
        %308 = vmatmul.mubr.f32.gmra.mxu0 %v226
        %v309 = vpop.f32.mrf.mxu0
        %v310 = vadd.f32 0.0, %v309
        %v311 = vpop.f32.mrf.mxu0
        %312 = vmatprep.mubr.f32.mxu0 0.0
        %313 = vmatmul.mubr.f32.gmra.mxu0 %v229
        %v314 = vpop.f32.mrf.mxu0
        %v315 = vadd.f32 0.0, %v314
        %v316 = vpop.f32.mrf.mxu0
        %317 = vmatprep.mubr.f32.mxu0 0.0
        %318 = vmatmul.mubr.f32.gmra.mxu0 %v232
        %v319 = vpop.f32.mrf.mxu0
        %v320 = vadd.f32 0.0, %v319
        %v321 = vpop.f32.mrf.mxu0
        %322 = vmatprep.mubr.f32.mxu0 0.0
        %323 = vmatmul.mubr.f32.gmra.mxu0 %v235
        %v324 = vpop.f32.mrf.mxu0
        %v325 = vadd.f32 0.0, %v324
        %v326 = vpop.f32.mrf.mxu0
        %327 = vmatprep.mubr.f32.mxu0 0.0
        %328 = vmatmul.mubr.f32.gmra.mxu0 %v238
        %v329 = vpop.f32.mrf.mxu0
        %v330 = vadd.f32 0.0, %v329
        %v331 = vpop.f32.mrf.mxu0
        %332 = vmatprep.mubr.f32.mxu0 0.0
        %333 = vmatmul.mubr.f32.gmra.mxu0 %v241
        %v334 = vpop.f32.mrf.mxu0
        %v335 = vadd.f32 0.0, %v334
        %v336 = vpop.f32.mrf.mxu0
        %337 = vdwg.mxu0
        %v338 = vld [vmem:[%s0] sm:$0xff]
        %v340 = vsel %vm224, %v338, 0
        %342 = vmatprep.subr.mxu0 0.0
        %343 = vmatpush1.msra.mxu0 0.0
        %344 = vmatprep.subr.mxu0 0.0
        %345 = vmatpush1.msra.mxu0 0.0
        %346 = vmatprep.subr.mxu0 0.0
        %347 = vmatpush1.msra.mxu0 0.0
        %348 = vmatprep.subr.mxu0 0.0
        %349 = vmatpush1.msra.mxu0 0.0
        %350 = vmatprep.subr.mxu0 0.0
        %351 = vmatpush1.msra.mxu0 0.0
        %352 = vmatprep.subr.mxu0 0.0
        %353 = vmatpush1.msra.mxu0 0.0
        %354 = vmatprep.subr.mxu0 0.0
        %355 = vmatpush1.msra.mxu0 0.0
        %356 = vmatprep.subr.mxu0 0.0
        %357 = vmatpush1.msra.mxu0 0.0
        %358 = vmatprep.subr.mxu0 0.0
        %359 = vmatpush1.msra.mxu0 0.0
        %360 = vmatprep.subr.mxu0 0.0
        %361 = vmatpush1.msra.mxu0 0.0
        %362 = vmatprep.subr.mxu0 0.0
        %363 = vmatpush1.msra.mxu0 0.0
        %364 = vmatprep.subr.mxu0 0.0
        %365 = vmatpush1.msra.mxu0 0.0
        %366 = vmatprep.subr.mxu0 0.0
        %367 = vmatpush1.msra.mxu0 0.0
        %368 = vmatprep.subr.mxu0 0.0
        %369 = vmatpush1.msra.mxu0 0.0
        %370 = vmatprep.subr.mxu0 %v325
        %371 = vmatpush1.msra.mxu0 %v315
        %372 = vmatprep.subr.mxu0 %v320
        %373 = vmatpush1.msra.mxu0 %v310
        %374 = vmatprep.subr.mxu0 0.0
        %375 = vmatpush2.msra.mxu0 0.0
        %376 = vmatprep.subr.mxu0 0.0
        %377 = vmatpush2.msra.mxu0 0.0
        %378 = vmatprep.subr.mxu0 0.0
        %379 = vmatpush2.msra.mxu0 0.0
        %380 = vmatprep.subr.mxu0 0.0
        %381 = vmatpush2.msra.mxu0 0.0
        %382 = vmatprep.subr.mxu0 0.0
        %383 = vmatpush2.msra.mxu0 0.0
        %384 = vmatprep.subr.mxu0 0.0
        %385 = vmatpush2.msra.mxu0 0.0
        %386 = vmatprep.subr.mxu0 0.0
        %387 = vmatpush2.msra.mxu0 0.0
        %388 = vmatprep.subr.mxu0 0.0
        %389 = vmatpush2.msra.mxu0 0.0
        %390 = vmatprep.subr.mxu0 0.0
        %391 = vmatpush2.msra.mxu0 0.0
        %392 = vmatprep.subr.mxu0 0.0
        %393 = vmatpush2.msra.mxu0 0.0
        %394 = vmatprep.subr.mxu0 0.0
        %395 = vmatpush2.msra.mxu0 0.0
        %396 = vmatprep.subr.mxu0 0.0
        %397 = vmatpush2.msra.mxu0 0.0
        %398 = vmatprep.subr.mxu0 0.0
        %399 = vmatpush2.msra.mxu0 0.0
        %400 = vmatprep.subr.mxu0 0.0
        %401 = vmatpush2.msra.mxu0 0.0
        %402 = vmatprep.subr.mxu0 0.0
        %403 = vmatpush2.msra.mxu0 0.0
        %404 = vmatprep.subr.mxu0 0.0
        %405 = vmatpush2.msra.mxu0 0.0
        %406 = vmatprep.mubr.f32.mxu0 0.0
        %407 = vmatmul.mubr.f32.gmra.mxu0 %v340
        %v408 = vpop.f32.mrf.mxu0
        %v409 = vadd.f32 0.0, %v408
        %v410 = vpop.f32.mrf.mxu0
        %v411 = vadd.f32 0.0, %v410
        %412 = vdwg.mxu0
        %413 = vmatprep.subr.mxu0 0.0
        %414 = vmatpush1.msra.mxu0 0.0
        %415 = vmatprep.subr.mxu0 0.0
        %416 = vmatpush1.msra.mxu0 0.0
        %417 = vmatprep.subr.mxu0 0.0
        %418 = vmatpush1.msra.mxu0 0.0
        %419 = vmatprep.subr.mxu0 0.0
        %420 = vmatpush1.msra.mxu0 0.0
        %421 = vmatprep.subr.mxu0 0.0
        %422 = vmatpush1.msra.mxu0 0.0
        %423 = vmatprep.subr.mxu0 0.0
        %424 = vmatpush1.msra.mxu0 0.0
        %425 = vmatprep.subr.mxu0 0.0
        %426 = vmatpush1.msra.mxu0 0.0
        %427 = vmatprep.subr.mxu0 0.0
        %428 = vmatpush1.msra.mxu0 0.0
        %429 = vmatprep.subr.mxu0 0.0
        %430 = vmatpush1.msra.mxu0 0.0
        %431 = vmatprep.subr.mxu0 0.0
        %432 = vmatpush1.msra.mxu0 0.0
        %433 = vmatprep.subr.mxu0 0.0
        %434 = vmatpush1.msra.mxu0 0.0
        %435 = vmatprep.subr.mxu0 0.0
        %436 = vmatpush1.msra.mxu0 0.0
        %437 = vmatprep.subr.mxu0 0.0
        %438 = vmatpush1.msra.mxu0 0.0
        %439 = vmatprep.subr.mxu0 0.0
        %440 = vmatpush1.msra.mxu0 0.0
        %441 = vmatprep.subr.mxu0 0.0
        %442 = vmatpush1.msra.mxu0 %v335
        %443 = vmatprep.subr.mxu0 0.0
        %444 = vmatpush1.msra.mxu0 %v330
        %445 = vmatprep.subr.mxu0 0.0
        %446 = vmatpush2.msra.mxu0 0.0
        %447 = vmatprep.subr.mxu0 0.0
        %448 = vmatpush2.msra.mxu0 0.0
        %449 = vmatprep.subr.mxu0 0.0
        %450 = vmatpush2.msra.mxu0 0.0
        %451 = vmatprep.subr.mxu0 0.0
        %452 = vmatpush2.msra.mxu0 0.0
        %453 = vmatprep.subr.mxu0 0.0
        %454 = vmatpush2.msra.mxu0 0.0
        %455 = vmatprep.subr.mxu0 0.0
        %456 = vmatpush2.msra.mxu0 0.0
        %457 = vmatprep.subr.mxu0 0.0
        %458 = vmatpush2.msra.mxu0 0.0
        %459 = vmatprep.subr.mxu0 0.0
        %460 = vmatpush2.msra.mxu0 0.0
        %461 = vmatprep.subr.mxu0 0.0
        %462 = vmatpush2.msra.mxu0 0.0
        %463 = vmatprep.subr.mxu0 0.0
        %464 = vmatpush2.msra.mxu0 0.0
        %465 = vmatprep.subr.mxu0 0.0
        %466 = vmatpush2.msra.mxu0 0.0
        %467 = vmatprep.subr.mxu0 0.0
        %468 = vmatpush2.msra.mxu0 0.0
        %469 = vmatprep.subr.mxu0 0.0
        %470 = vmatpush2.msra.mxu0 0.0
        %471 = vmatprep.subr.mxu0 0.0
        %472 = vmatpush2.msra.mxu0 0.0
        %473 = vmatprep.subr.mxu0 0.0
        %474 = vmatpush2.msra.mxu0 0.0
        %475 = vmatprep.subr.mxu0 0.0
        %476 = vmatpush2.msra.mxu0 0.0
        %477 = vmatprep.mubr.f32.mxu0 0.0
        %478 = vmatmul.mubr.f32.gmra.mxu0 %v340
        %v479 = vpop.f32.mrf.mxu0
        %v480 = vadd.f32 0.0, %v479
        %v481 = vpop.f32.mrf.mxu0
        %482 = vdwg.mxu0
        %v483 = vld [vmem:[%s215] sm:$0xff]
        %v484 = vld [vmem:[%s215 + $0x8] sm:$0xff]
        %v485 = vld [vmem:[%s215 + $0x10] sm:$0xff]
        %v486 = vsub.f32 %v409, %v483
        %v487 = vsub.f32 %v411, %v484
        %v488 = vsub.f32 %v480, %v485
        %v489 = vand.u32 2147483647, %v486
        %v490 = vand.u32 2147483647, %v487
        %v491 = vand.u32 2147483647, %v488
        %v492 = vrot.slane %v489, 4
        %v493 = vadd.f32 %v489, %v492
        %v494 = vrot.slane %v493, 2
        %v495 = vadd.f32 %v493, %v494
        %v496 = vrot.slane %v495, 1
        %v497 = vadd.f32 %v495, %v496
        %v498 = vrot.slane %v490, 4
        %v499 = vadd.f32 %v490, %v498
        %v500 = vrot.slane %v499, 2
        %v501 = vadd.f32 %v499, %v500
        %v502 = vrot.slane %v501, 1
        %v503 = vadd.f32 %v501, %v502
        %v504 = vrot.slane %v491, 4
        %v505 = vadd.f32 %v491, %v504
        %v506 = vrot.slane %v505, 2
        %v507 = vadd.f32 %v505, %v506
        %v508 = vrot.slane %v507, 1
        %v509 = vadd.f32 %v507, %v508
        %v513 = vcombine.low %v497, %v503
        %v515 = vunpack.c.l.s4 1966171168
        %v516 = vunpack.c.0.s8 %v515
        %v517 = vlaneseq
        %v518 = vshrl.u32 %v517, 7
        %v519 = vsub.s32 %v516, %v518
        %v520 = vrot.slane %v513, %v519
        %v522 = vunpack.c.l.s4 1966171168
        %v523 = vunpack.c.0.s8 %v522
        %v524 = vlaneseq
        %v525 = vshrl.u32 %v524, 7
        %v526 = vsub.s32 %v523, %v525
        %v527 = vrot.slane %v509, %v526
        %v528 = vcombine.low %v520, %v527
        %v530 = vunpack.c.l.s4 1966171168
        %v531 = vunpack.c.0.s8 %v530
        %v532 = vlaneseq
        %v533 = vshrl.u32 %v532, 7
        %v534 = vsub.s32 %v531, %v533
        %v535 = vrot.slane %v528, %v534
        %v537 = vlaneseq
        %vm538 = vcmp.ge.s32.totalorder %v537, 0
        %vm539 = vcmp.lt.s32.totalorder %v537, 384
        %vm540 = vmand %vm538, %vm539
        %541 = vst.msk [vmem:[%s205] sm:$0x7] %vm540, %v535
        %s542 = sand.u32 %s120, 1
        %s543 = scalar_lea.sflag [#allocation3], %s542
        %s544 = sand.u32 %s120, 1
        %s545 = smul.addr %s544, 3
        %s546 = scalar_lea.vmem [#allocation2], %s545
        // Predicated region
        $region37: #{tpu_custom_call.1} parent=35 // pred_check
          %p547 = pneg %p130
        $region38: #{tpu_custom_call.1} parent=35 // pred_check_branch
          %549 = sbr.rel (%p547) target = $region40
        $region39: #{tpu_custom_call.1} parent=35 // pred_region
          %s551 = ssub.s32 48, 48
          %552 = vsyncadd %s543, %s551
          %s553 = smul.addr %s18, 3
          %s554 = smul.addr %s553, 16
          %s555 = scalar_lea.hbm %s4, %s554
          %s557 = sshll.u32 %s546, 4
          %s558 = int_to_ptr.vmem [resolvable:$true] %s557
          %560 = dma.vmem_to_hbm [thread:$0]  %s558, 48, %s555, %s543
        $region40: #{tpu_custom_call.1} parent=35 // pred_fallthru
          _
      $region36: #{tpu_custom_call.1} parent=5 // pred_fallthru
        _
      %p561 = scmp.le.s32.totalorder 2, %s13
      // Predicated region
      $region41: #{tpu_custom_call.1} parent=5 // pred_check
        %p562 = pneg %p561
      $region42: #{tpu_custom_call.1} parent=5 // pred_check_branch
        %564 = sbr.rel (%p562) target = $region44
      $region43: #{tpu_custom_call.1} parent=5 // pred_region
        %s565 = ssub.s32 %s13, 2
        // Predicated region
        $region45: #{tpu_custom_call.1} parent=43 // pred_check
          %p566 = pneg %p136
        $region46: #{tpu_custom_call.1} parent=43 // pred_check_branch
          %568 = sbr.rel (%p566) target = $region48
        $region47: #{tpu_custom_call.1} parent=43 // pred_region
          %s569 = sand.u32 %s121, 1
          %s570 = scalar_lea.sflag [#allocation3], %s569
          %s571 = sand.u32 %s121, 1
          %s572 = smul.addr %s571, 3
          %s573 = scalar_lea.vmem [#allocation2], %s572
          %574 = dma.done %s570, 48
        $region48: #{tpu_custom_call.1} parent=43 // pred_fallthru
          _
      $region44: #{tpu_custom_call.1} parent=5 // pred_fallthru
        _
    $region6: #{tpu_custom_call.1} parent=1 // loop_footer
      %s17 = sadd.s32 1, %s13
    $region7: #{tpu_custom_call.1} parent=1 // loop_footer_branch
      %12 = sbr.rel target = $region3
    $region8: #{tpu_custom_call.1} parent=1 // loop_exit
      _
    %575 = vsyncpa [#allocation3], 1
    %s576 = scalar_lea.sflag [#allocation3], 1
    %577 = vsyncpa %s576, 1

</llo_original>
